<compile_context>
chip_gen: v7x
topology: tpu7x:2x2x1
jax: 0.10.0
libtpu: 0.0.40
codegen_flags: <defaults>
</compile_context>

<pallas_src>
import functools

import jax
import jax.numpy as jnp
from jax import lax
from jax.experimental import pallas as pl
from jax.experimental.pallas import tpu as pltpu

_LANES = 128
_SUBLANES = 8
# (2048, 128) f32 chunk = 1 MiB per input; 2 inputs x 2 pipeline buffers = 4 MiB
# live VMEM -> fits v5e's 16 MiB scoped default and v7x's smaller physical VMEM.
_DEFAULT_ROWS_CHUNK = 2048
_VMEM_LIMIT_BYTES = 32 * 1024 * 1024


def _round_up(x, m):
    return (x + m - 1) // m * m


def _ssq_kernel(l_ref, p_ref, out_ref, acc_ref, *, total_rows, needs_mask):
    """Accumulate sum((l - p)^2) over row-chunks of a (total_rows, 128) view."""
    c = pl.program_id(0)

    @pl.when(c == 0)
    def _():
        acc_ref[...] = jnp.zeros_like(acc_ref)

    # Upcast in-kernel (keeps HBM DMA at the source dtype width, e.g. bf16).
    l = l_ref[...].astype(jnp.float32)
    p = p_ref[...].astype(jnp.float32)
    d = l - p
    dsq = d * d

    if needs_mask:
        # Ragged last chunk: rows at/after `total_rows` hold unspecified data.
        rows = l_ref.shape[0]
        row_idx = lax.broadcasted_iota(jnp.int32, (rows, _LANES), 0) + c * rows
        dsq = jnp.where(row_idx < total_rows, dsq, 0.0)

    # Cheap VPU reduce along the leading axis only; keep (8, 128) partial sums
    # resident and do the expensive cross-lane reduce once at the end.
    acc_ref[...] += jnp.sum(dsq.reshape(-1, _SUBLANES, _LANES), axis=0)

    @pl.when(c == pl.num_programs(0) - 1)
    def _():
        out_ref[0] = jnp.sum(acc_ref[...])


def _sum_sq_diff_pallas(label, pred, *, rows_chunk=_DEFAULT_ROWS_CHUNK):
    """sum((label - pred)^2) over all elements, via a chunked Pallas reduction."""
    m = label.size
    flat_l = label.reshape(-1)   # free for contiguous inputs
    flat_p = pred.reshape(-1)

    # View as (R, 128).  For the common case M % 1024 == 0 this is a free
    # reshape; otherwise zero-pad just this component (zeros add 0 to the sum).
    m_pad = _round_up(m, _SUBLANES * _LANES)
    if m_pad != m:
        flat_l = jnp.pad(flat_l, (0, m_pad - m))
        flat_p = jnp.pad(flat_p, (0, m_pad - m))
    total_rows = m_pad // _LANES

    rows_chunk_eff = min(int(rows_chunk), total_rows)
    rows_chunk_eff = max(_SUBLANES, rows_chunk_eff - (rows_chunk_eff % _SUBLANES))
    num_chunks = (total_rows + rows_chunk_eff - 1) // rows_chunk_eff
    needs_mask = (total_rows % rows_chunk_eff) != 0

    L = flat_l.reshape(total_rows, _LANES)
    P = flat_p.reshape(total_rows, _LANES)

    kernel = functools.partial(
        _ssq_kernel, total_rows=total_rows, needs_mask=needs_mask)

    ssq = pl.pallas_call(
        kernel,
        out_shape=jax.ShapeDtypeStruct((1,), jnp.float32),
        grid=(num_chunks,),
        in_specs=[
            pl.BlockSpec((rows_chunk_eff, _LANES), lambda c: (c, 0)),
            pl.BlockSpec((rows_chunk_eff, _LANES), lambda c: (c, 0)),
        ],
        out_specs=pl.BlockSpec(memory_space=pltpu.SMEM),
        scratch_shapes=[pltpu.VMEM((_SUBLANES, _LANES), jnp.float32)],
        compiler_params=pltpu.CompilerParams(
            dimension_semantics=("arbitrary",),      # reduction axis
            vmem_limit_bytes=_VMEM_LIMIT_BYTES),
    )(L, P)
    return ssq[0]


def weighted_mse_loss(labels, preds, alpha, *,
                      rows_chunk=_DEFAULT_ROWS_CHUNK,
                      min_pallas_elems=0):
    """labels, preds: lists of n_components arrays (same shape per pair)."""
    n = alpha.shape[0]
    assert len(labels) == n and len(preds) == n, \
        "Number of loss components should be even."

    # Parameter mapping (glue): softmax(alpha) * n_components
    weights = jax.nn.softmax(alpha.astype(jnp.float32), axis=0) * n

    ssqs = []
    inv_sizes = []
    for lbl, prd in zip(labels, preds):
        assert lbl.shape == prd.shape
        m = lbl.size
        inv_sizes.append(1.0 / float(m))
        if m < min_pallas_elems:
            # Tiny components: plain XLA fuses this fine; kernel launch and
            # per-step overhead would dominate.
            d = lbl.astype(jnp.float32) - prd.astype(jnp.float32)
            ssqs.append(jnp.sum(d * d))
        else:
            ssqs.append(_sum_sq_diff_pallas(lbl, prd, rows_chunk=rows_chunk))

    ssq = jnp.stack(ssqs)                       # (n,) scalars — negligible
    inv_m = jnp.asarray(inv_sizes, dtype=jnp.float32)
    return weights * ssq * inv_m


if __name__ == "__main__":
    n_components = 3
    shape = (2, 4, 16, 16)  # NCHW per component

    key = jax.random.PRNGKey(0)
    keys = jax.random.split(key, 2 * n_components)
    labels = [jax.random.normal(keys[i], shape, dtype=jnp.float32)
              for i in range(n_components)]
    preds = [jax.random.normal(keys[n_components + i], shape, dtype=jnp.float32)
             for i in range(n_components)]

    # alpha parameter initialized deterministically to zeros (as in __init__)
    alpha = jnp.zeros((n_components,), dtype=jnp.float32)

    # min_pallas_elems=0 forces the Pallas path even for this small demo shape.
    losses = weighted_mse_loss(labels, preds, alpha, min_pallas_elems=0)
    losses = jax.block_until_ready(losses)

    # pure-JAX reference check
    w_ref = jax.nn.softmax(alpha) * n_components
    ref = jnp.stack([w_ref[i] * jnp.mean(jnp.square(labels[i] - preds[i]))
                     for i in range(n_components)])
    assert losses.shape == (n_components,)
    assert jnp.allclose(losses, ref, rtol=1e-5, atol=1e-5), (losses, ref)

    print("KERNEL_OK")
</pallas_src>

<mosaic_0001>
module attributes {stable_mosaic.version = 11 : i64} {
  func.func @_ssq_kernel(%arg0: i32, %arg1: memref<16x128xf32, #tpu.memory_space<vmem>>, %arg2: memref<16x128xf32, #tpu.memory_space<vmem>>, %arg3: memref<1xf32, #tpu.memory_space<smem>>, %arg4: memref<8x128xf32, #tpu.memory_space<vmem>>) attributes {dimension_semantics = [#tpu.dimension_semantics<arbitrary>], iteration_bounds = array<i64: 1>, scalar_prefetch = 0 : i64, scratch_operands = 1 : i64, tpu.core_type = #tpu.core_type<tc>, window_params = [{transform_indices = @transform_0, window_bounds = array<i64: 16, 128>}, {transform_indices = @transform_1, window_bounds = array<i64: 16, 128>}, {transform_indices = @transform_2, window_bounds = array<i64: 1>}]} {
    %c0_i32 = arith.constant 0 : i32
    %0 = arith.cmpi eq, %arg0, %c0_i32 : i32
    %1 = arith.extui %0 : i1 to i32
    %c0_i32_0 = arith.constant 0 : i32
    %2 = arith.cmpi ne, %1, %c0_i32_0 : i32
    scf.if %2 {
      %cst_10 = arith.constant 0.000000e+00 : f32
      %15 = vector.broadcast %cst_10 : f32 to vector<8x128xf32>
      %c0_11 = arith.constant 0 : index
      %c0_12 = arith.constant 0 : index
      %16 = vector.load %arg4[%c0_11, %c0_12] : memref<8x128xf32, #tpu.memory_space<vmem>>, vector<8x128xf32>
      tpu.vector_store %arg4[%c0_11, %c0_12], %15 {strides = array<i32>} : memref<8x128xf32, #tpu.memory_space<vmem>>, vector<8x128xf32>,
    } else {
    }
    %c0 = arith.constant 0 : index
    %c0_1 = arith.constant 0 : index
    %3 = vector.load %arg1[%c0, %c0_1] : memref<16x128xf32, #tpu.memory_space<vmem>>, vector<16x128xf32>
    %c0_2 = arith.constant 0 : index
    %c0_3 = arith.constant 0 : index
    %4 = vector.load %arg2[%c0_2, %c0_3] : memref<16x128xf32, #tpu.memory_space<vmem>>, vector<16x128xf32>
    %5 = arith.subf %3, %4 : vector<16x128xf32>
    %6 = arith.mulf %5, %5 : vector<16x128xf32>
    %c0_4 = arith.constant 0 : index
    %c0_5 = arith.constant 0 : index
    %7 = vector.load %arg4[%c0_4, %c0_5] : memref<8x128xf32, #tpu.memory_space<vmem>>, vector<8x128xf32>
    %8 = vector.shape_cast %6 : vector<16x128xf32> to vector<2x8x128xf32>
    %cst = arith.constant dense<0.000000e+00> : vector<8x128xf32>
    %9 = vector.multi_reduction <add>, %8, %cst [0] : vector<2x8x128xf32> to vector<8x128xf32>
    %10 = arith.addf %7, %9 : vector<8x128xf32>
    %c0_6 = arith.constant 0 : index
    %c0_7 = arith.constant 0 : index
    %11 = vector.load %arg4[%c0_6, %c0_7] : memref<8x128xf32, #tpu.memory_space<vmem>>, vector<8x128xf32>
    tpu.vector_store %arg4[%c0_6, %c0_7], %10 {strides = array<i32>} : memref<8x128xf32, #tpu.memory_space<vmem>>, vector<8x128xf32>,
    %c0_i32_8 = arith.constant 0 : i32
    %12 = arith.cmpi eq, %arg0, %c0_i32_8 : i32
    %13 = arith.extui %12 : i1 to i32
    %c0_i32_9 = arith.constant 0 : i32
    %14 = arith.cmpi ne, %13, %c0_i32_9 : i32
    scf.if %14 {
      %c0_10 = arith.constant 0 : index
      %c0_11 = arith.constant 0 : index
      %15 = vector.load %arg4[%c0_10, %c0_11] : memref<8x128xf32, #tpu.memory_space<vmem>>, vector<8x128xf32>
      %16 = vector.shape_cast %15 : vector<8x128xf32> to vector<1x8x128xf32>
      %cst_12 = arith.constant dense<0.000000e+00> : vector<1xf32>
      %17 = vector.multi_reduction <add>, %16, %cst_12 [1, 2] : vector<1x8x128xf32> to vector<1xf32>
      %18 = vector.shape_cast %17 : vector<1xf32> to vector<1x1x1xf32>
      %19 = vector.extract %18[0, 0, 0] : f32 from vector<1x1x1xf32>
      %c0_13 = arith.constant 0 : index
      %20 = memref.load %arg3[%c0_13] : memref<1xf32, #tpu.memory_space<smem>>
      memref.store %19, %arg3[%c0_13] : memref<1xf32, #tpu.memory_space<smem>>
    } else {
    }
    return
  }
  func.func @transform_0(%arg0: i32) -> (i32, i32) {
    %c0_i32 = arith.constant 0 : i32
    %c0_i32_0 = arith.constant 0 : i32
    return %arg0, %c0_i32 : i32, i32
  }
  func.func @transform_1(%arg0: i32) -> (i32, i32) {
    %c0_i32 = arith.constant 0 : i32
    %c0_i32_0 = arith.constant 0 : i32
    return %arg0, %c0_i32 : i32, i32
  }
  func.func @transform_2(%arg0: i32) -> i32 {
    %c0_i32 = arith.constant 0 : i32
    %c0_i32_0 = arith.constant 0 : i32
    return %c0_i32 : i32
  }
}

</mosaic_0001>

<llo_original>
// kernel: tpu_custom_call.1
$region0: #{tpu_custom_call.1}
  #allocation0 [shape = 'u32[]', space=smem, size = 0x4, offset = 0x4, fixed_abs, tag = 'smem constant byte address 0x4 - core index']
  #allocation1 [shape = 'u32[144,128]{1,0:T(1,128)}', space=vmem, size = 0x12000, scoped, tag = 'internal scratch']
  #allocation2 [shape = 'f32[8,128]{1,0:T(8,128)}', space=vmem, size = 0x1000, scoped, tag = 'scratch operand']
  %s0 = inlined_call_operand.hbm [shape: f32[16,128], index: 0, kind: input, shape index: {}]
  %s1 = inlined_call_operand.hbm [shape: f32[16,128], index: 1, kind: input, shape index: {}]
  %s2 = inlined_call_operand.hbm [shape: f32[1], index: 2, kind: output, shape index: {}]
  %s3 = sld [smem:[#allocation0]]
  $region34: #{tpu_custom_call.1} parent=0
    _
  %s5 = ssub.s32 1, %s3
  %s6 = scalar_select 0, %s5, %s3
  $region1: #{tpu_custom_call.1} parent=0
    #allocation3 [shape = 'u8[8192]{0}', space=vmem, size = 0x2000, scoped, tag = 'input window, operand 0, single buffered']
    #allocation4 [shape = 's32[1]{0}', space=sflag, size = 0x4, scoped, tag = 'scoped memory for tpu_custom_call.1']
    #allocation5 [shape = 's32[1]{0}', space=sflag, size = 0x4, scoped, tag = 'scoped memory for tpu_custom_call.1']
    #allocation6 [shape = 'u8[8192]{0}', space=vmem, size = 0x2000, scoped, tag = 'input window, operand 1, single buffered']
    #allocation7 [shape = 's32[1]{0}', space=sflag, size = 0x4, scoped, tag = 'scoped memory for tpu_custom_call.1']
    #allocation8 [shape = 'u8[512]{0}', space=smem, size = 0x200, scoped, tag = 'output window, operand 0, single buffered']
    %7 = vsyncpa [#allocation4], 0
    %8 = vsyncpa [#allocation7], 0
    %9 = vsyncpa [#allocation5], 0
    // Predicated region
    $region2: #{tpu_custom_call.1} parent=1 // pred_check
      _
    $region3: #{tpu_custom_call.1} parent=1 // pred_check_branch
      %11 = sbr.rel (0) target = $region5
    $region4: #{tpu_custom_call.1} parent=1 // pred_region
      %s13 = ssub.s32 256, 256
      %14 = vsyncadd [#allocation4], %s13
      %s15 = sshll.u32 [#allocation3], 4
      %s16 = int_to_ptr.vmem [resolvable:$true] %s15
      %21 = dma.hbm_to_vmem [thread:$0]  %s0, 256, %s16, [#allocation4], 128, 128, 8
    $region5: #{tpu_custom_call.1} parent=1 // pred_fallthru
      _
    // Predicated region
    $region6: #{tpu_custom_call.1} parent=1 // pred_check
      _
    $region7: #{tpu_custom_call.1} parent=1 // pred_check_branch
      %23 = sbr.rel (0) target = $region9
    $region8: #{tpu_custom_call.1} parent=1 // pred_region
      %s25 = ssub.s32 256, 256
      %26 = vsyncadd [#allocation7], %s25
      %s27 = sshll.u32 [#allocation6], 4
      %s28 = int_to_ptr.vmem [resolvable:$true] %s27
      %33 = dma.hbm_to_vmem [thread:$0]  %s1, 256, %s28, [#allocation7], 128, 128, 8
    $region9: #{tpu_custom_call.1} parent=1 // pred_fallthru
      _
    // Predicated region
    $region10: #{tpu_custom_call.1} parent=1 // pred_check
      _
    $region11: #{tpu_custom_call.1} parent=1 // pred_check_branch
      %35 = sbr.rel (0) target = $region13
    $region12: #{tpu_custom_call.1} parent=1 // pred_region
      %36 = dma.done [#allocation4], 256
    $region13: #{tpu_custom_call.1} parent=1 // pred_fallthru
      _
    // Predicated region
    $region14: #{tpu_custom_call.1} parent=1 // pred_check
      _
    $region15: #{tpu_custom_call.1} parent=1 // pred_check_branch
      %38 = sbr.rel (0) target = $region17
    $region16: #{tpu_custom_call.1} parent=1 // pred_region
      %39 = dma.done [#allocation7], 256
    $region17: #{tpu_custom_call.1} parent=1 // pred_fallthru
      _
    %p40 = scmp.eq.s32.totalorder 0, 0
    // Predicated region
    $region18: #{tpu_custom_call.1} parent=1 // pred_check
      %p41 = pneg %p40
    $region19: #{tpu_custom_call.1} parent=1 // pred_check_branch
      %43 = sbr.rel (%p41) target = $region21
    $region20: #{tpu_custom_call.1} parent=1 // pred_region
      %44 = vst [vmem:[#allocation2] sm:$0xff] 0.0
    $region21: #{tpu_custom_call.1} parent=1 // pred_fallthru
      _
    %v45 = vld [vmem:[#allocation3] sm:$0xff]
    %v46 = vld [vmem:[#allocation3 + $0x8] sm:$0xff]
    %v47 = vld [vmem:[#allocation6] sm:$0xff]
    %v48 = vld [vmem:[#allocation6 + $0x8] sm:$0xff]
    %v49 = vsub.f32 %v45, %v47
    %v50 = vsub.f32 %v46, %v48
    %v51 = vmul.f32 %v49, %v49
    %v52 = vmul.f32 %v50, %v50
    %v53 = vld [vmem:[#allocation2] sm:$0xff]
    %v54 = vadd.f32 %v51, %v52
    %v55 = vadd.f32 %v53, %v54
    %56 = vst [vmem:[#allocation2] sm:$0xff] %v55
    // Predicated region
    $region22: #{tpu_custom_call.1} parent=1 // pred_check
      %p57 = pneg %p40
    $region23: #{tpu_custom_call.1} parent=1 // pred_check_branch
      %59 = sbr.rel (%p57) target = $region25
    $region24: #{tpu_custom_call.1} parent=1 // pred_region
      %v60 = vld [vmem:[#allocation2] sm:$0xff]
      %61 = vadd.xlane.f32.xlu0 %v60
      %v62 = vpop.xlane.xlu0 %61
      %v63 = vrot.slane %v62, 4
      %v64 = vadd.f32 %v62, %v63
      %v65 = vrot.slane %v64, 2
      %v66 = vadd.f32 %v64, %v65
      %v67 = vrot.slane %v66, 1
      %v68 = vadd.f32 %v66, %v67
      %s69 = vtos %v68
      %s70 = scalar_lea.smem [#allocation8], 0
      %71 = sst [smem:[%s70]] %s69
    $region25: #{tpu_custom_call.1} parent=1 // pred_fallthru
      _
    // Predicated region
    $region26: #{tpu_custom_call.1} parent=1 // pred_check
      _
    $region27: #{tpu_custom_call.1} parent=1 // pred_check_branch
      %73 = sbr.rel (0) target = $region29
    $region28: #{tpu_custom_call.1} parent=1 // pred_region
      %s75 = ssub.s32 16, 16
      %76 = vsyncadd [#allocation5], %s75
      %79 = dma.smem_to_hbm [#allocation8], 16, %s2, [#allocation5]
    $region29: #{tpu_custom_call.1} parent=1 // pred_fallthru
      _
    // Predicated region
    $region30: #{tpu_custom_call.1} parent=1 // pred_check
      _
    $region31: #{tpu_custom_call.1} parent=1 // pred_check_branch
      %81 = sbr.rel (0) target = $region33
    $region32: #{tpu_custom_call.1} parent=1 // pred_region
      %82 = dma.done [#allocation5], 16
    $region33: #{tpu_custom_call.1} parent=1 // pred_fallthru
      _
    %83 = sfence
    %84 = vsyncpa [#allocation4], 1
    %85 = vsyncpa [#allocation7], 1
    %86 = vsyncpa [#allocation5], 1

</llo_original>
